<compile_context>
chip_gen: v6e
topology: v6e:2x2x1
jax: 0.10.0
libtpu: 0.0.40
codegen_flags: <defaults>
</compile_context>

<pallas_src>
import functools

import jax
import jax.numpy as jnp
from jax.experimental import pallas as pl
from jax.experimental.pallas import tpu as pltpu

_MIN_KERNEL_BATCH = 256  # below this, plain XLA is strictly faster


def _round_up(n, m):
    return ((n + m - 1) // m) * m


def _linear_add_kernel(x_ref, wb_ref, o_ref):
    """Fused linear + broadcast-add kernel (pure VPU, lane-dense batch).

    x_ref : (4, TB) f32 VMEM  -- features on sublanes, batch lane-dense.
    wb_ref: (10,)   f32 SMEM  -- [w00..w03, w10..w13, add0, add1] where
                                 add_o = bias_o + dropout(y).
    o_ref : (2, TB) f32 VMEM  -- output features on sublanes, batch lane-dense.
    """
    # Per-row loads (each row lands aligned at sublane 0).
    x0 = x_ref[0:1, :]
    x1 = x_ref[1:2, :]
    x2 = x_ref[2:3, :]
    x3 = x_ref[3:4, :]

    # Unrolled K=4 FMAs per output feature; scalars splat from SMEM.
    row0 = (x0 * wb_ref[0] + x1 * wb_ref[1]
            + x2 * wb_ref[2] + x3 * wb_ref[3] + wb_ref[8])
    row1 = (x0 * wb_ref[4] + x1 * wb_ref[5]
            + x2 * wb_ref[6] + x3 * wb_ref[7] + wb_ref[9])

    # Single store of the whole (2, TB) block.
    o_ref[...] = jnp.concatenate([row0, row1], axis=0)


@functools.partial(jax.jit, static_argnames=("training", "block_b"))
def model_forward(y, x, weight, bias, key, training=True, block_b=8192):
    """y: (1,1,1) f32, x: (B,4), weight: (2,4), bias: (2,) -> (1, B, 2)."""
    B = x.shape[0]

    # Dropout(p=0.5) on the single-element y (portable RNG).
    y_scalar = y.reshape(()).astype(jnp.float32)
    if training:
        keep = jax.random.bernoulli(key, 0.5)
        y_drop = jnp.where(keep, y_scalar * 2.0, 0.0)  # scale by 1/(1-p)
    else:
        y_drop = y_scalar

    weight_f32 = weight.astype(jnp.float32)
    add_vec = bias.astype(jnp.float32) + y_drop                   # (2,)
    x_f32 = x.astype(jnp.float32)

    # Tiny batch: a fused XLA matmul/elementwise beats any custom-call launch.
    if B < _MIN_KERNEL_BATCH:
        out_b2 = x_f32 @ weight_f32.T + add_vec                   # (B, 2)
        return out_b2.reshape(1, B, 2)

    # Pack weight + (bias + dropped y) into one 10-float SMEM packet.
    wb = jnp.concatenate([weight_f32.reshape(-1), add_vec])       # (10,)

    # Lane-dense presentation: features on sublanes, batch on lanes.
    # Pad batch up to a multiple of the lane tile so every block is full.
    tb = min(block_b, _round_up(B, 128))
    Bp = _round_up(B, tb)
    x_t = jnp.pad(x_f32, ((0, Bp - B), (0, 0))).T                 # (4, Bp)

    out_2b = pl.pallas_call(
        _linear_add_kernel,
        out_shape=jax.ShapeDtypeStruct((2, Bp), jnp.float32),
        grid=(Bp // tb,),
        in_specs=[
            pl.BlockSpec((4, tb), lambda i: (0, i)),               # x tiles
            pl.BlockSpec(memory_space=pltpu.MemorySpace.SMEM),     # wb scalars
        ],
        out_specs=pl.BlockSpec((2, tb), lambda i: (0, i)),
        compiler_params=pltpu.CompilerParams(
            dimension_semantics=("parallel",),       # megacore sharding on v7x
            allow_input_fusion=[True, False],        # fuse transpose/pad into x
        ),
        cost_estimate=pl.CostEstimate(
            flops=16 * Bp, transcendentals=0, bytes_accessed=24 * Bp),
    )(x_t, wb)

    # (2, Bp) -> (B, 2) -> torch broadcast result (1, B, 2)
    return out_2b[:, :B].T.reshape(1, B, 2)


if __name__ == "__main__":
    root = jax.random.PRNGKey(0)
    k_y, k_x, k_w, k_b, k_drop = jax.random.split(root, 5)

    # y = torch.exp(torch.randn(1, 1, 1))
    y = jnp.exp(jax.random.normal(k_y, (1, 1, 1), dtype=jnp.float32))

    # Batch large enough to exercise the Pallas path with a 2-step grid.
    B = 512
    x = jax.random.normal(k_x, (B, 4), dtype=jnp.float32)

    # Deterministic synthetic Linear(4, 2) parameters.
    weight = jax.random.normal(k_w, (2, 4), dtype=jnp.float32) * 0.5
    bias = jax.random.normal(k_b, (2,), dtype=jnp.float32) * 0.1

    out = model_forward(y, x, weight, bias, k_drop, block_b=256)
    out = jax.block_until_ready(out)

    # Sanity check against the two possible dropout outcomes.
    lin = x @ weight.T + bias                     # (B, 2)
    ref_keep = lin + 2.0 * y.reshape(())          # y kept (scaled by 2)
    ref_drop = lin                                # y dropped
    matches = (jnp.allclose(out[0], ref_keep, atol=1e-5, rtol=1e-5) or
               jnp.allclose(out[0], ref_drop, atol=1e-5, rtol=1e-5))

    assert out.shape == (1, B, 2)
    assert jnp.all(jnp.isfinite(out))
    assert bool(matches)
    print("KERNEL_OK")
</pallas_src>

<mosaic_0001>
module attributes {stable_mosaic.version = 11 : i64} {
  func.func @_linear_add_kernel(%arg0: i32, %arg1: memref<4x256xf32, #tpu.memory_space<vmem>>, %arg2: memref<10xf32, #tpu.memory_space<smem>>, %arg3: memref<2x256xf32, #tpu.memory_space<vmem>>) attributes {dimension_semantics = [#tpu.dimension_semantics<parallel>], iteration_bounds = array<i64: 2>, scalar_prefetch = 0 : i64, scratch_operands = 0 : i64, tpu.core_type = #tpu.core_type<tc>, window_params = [{transform_indices = @transform_0, window_bounds = array<i64: 4, 256>}, {transform_indices = @transform_1, window_bounds = array<i64: 10>}, {transform_indices = @transform_2, window_bounds = array<i64: 2, 256>}]} {
    %c0 = arith.constant 0 : index
    %c0_0 = arith.constant 0 : index
    %0 = vector.load %arg1[%c0, %c0_0] : memref<4x256xf32, #tpu.memory_space<vmem>>, vector<1x256xf32>
    %c1 = arith.constant 1 : index
    %c0_1 = arith.constant 0 : index
    %1 = vector.load %arg1[%c1, %c0_1] : memref<4x256xf32, #tpu.memory_space<vmem>>, vector<1x256xf32>
    %c2 = arith.constant 2 : index
    %c0_2 = arith.constant 0 : index
    %2 = vector.load %arg1[%c2, %c0_2] : memref<4x256xf32, #tpu.memory_space<vmem>>, vector<1x256xf32>
    %c3 = arith.constant 3 : index
    %c0_3 = arith.constant 0 : index
    %3 = vector.load %arg1[%c3, %c0_3] : memref<4x256xf32, #tpu.memory_space<vmem>>, vector<1x256xf32>
    %c0_4 = arith.constant 0 : index
    %4 = memref.load %arg2[%c0_4] : memref<10xf32, #tpu.memory_space<smem>>
    %5 = vector.broadcast %4 : f32 to vector<1x256xf32>
    %6 = arith.mulf %0, %5 : vector<1x256xf32>
    %c1_5 = arith.constant 1 : index
    %7 = memref.load %arg2[%c1_5] : memref<10xf32, #tpu.memory_space<smem>>
    %8 = vector.broadcast %7 : f32 to vector<1x256xf32>
    %9 = arith.mulf %1, %8 : vector<1x256xf32>
    %10 = arith.addf %6, %9 : vector<1x256xf32>
    %c2_6 = arith.constant 2 : index
    %11 = memref.load %arg2[%c2_6] : memref<10xf32, #tpu.memory_space<smem>>
    %12 = vector.broadcast %11 : f32 to vector<1x256xf32>
    %13 = arith.mulf %2, %12 : vector<1x256xf32>
    %14 = arith.addf %10, %13 : vector<1x256xf32>
    %c3_7 = arith.constant 3 : index
    %15 = memref.load %arg2[%c3_7] : memref<10xf32, #tpu.memory_space<smem>>
    %16 = vector.broadcast %15 : f32 to vector<1x256xf32>
    %17 = arith.mulf %3, %16 : vector<1x256xf32>
    %18 = arith.addf %14, %17 : vector<1x256xf32>
    %c8 = arith.constant 8 : index
    %19 = memref.load %arg2[%c8] : memref<10xf32, #tpu.memory_space<smem>>
    %20 = vector.broadcast %19 : f32 to vector<1x256xf32>
    %21 = arith.addf %18, %20 : vector<1x256xf32>
    %c4 = arith.constant 4 : index
    %22 = memref.load %arg2[%c4] : memref<10xf32, #tpu.memory_space<smem>>
    %23 = vector.broadcast %22 : f32 to vector<1x256xf32>
    %24 = arith.mulf %0, %23 : vector<1x256xf32>
    %c5 = arith.constant 5 : index
    %25 = memref.load %arg2[%c5] : memref<10xf32, #tpu.memory_space<smem>>
    %26 = vector.broadcast %25 : f32 to vector<1x256xf32>
    %27 = arith.mulf %1, %26 : vector<1x256xf32>
    %28 = arith.addf %24, %27 : vector<1x256xf32>
    %c6 = arith.constant 6 : index
    %29 = memref.load %arg2[%c6] : memref<10xf32, #tpu.memory_space<smem>>
    %30 = vector.broadcast %29 : f32 to vector<1x256xf32>
    %31 = arith.mulf %2, %30 : vector<1x256xf32>
    %32 = arith.addf %28, %31 : vector<1x256xf32>
    %c7 = arith.constant 7 : index
    %33 = memref.load %arg2[%c7] : memref<10xf32, #tpu.memory_space<smem>>
    %34 = vector.broadcast %33 : f32 to vector<1x256xf32>
    %35 = arith.mulf %3, %34 : vector<1x256xf32>
    %36 = arith.addf %32, %35 : vector<1x256xf32>
    %c9 = arith.constant 9 : index
    %37 = memref.load %arg2[%c9] : memref<10xf32, #tpu.memory_space<smem>>
    %38 = vector.broadcast %37 : f32 to vector<1x256xf32>
    %39 = arith.addf %36, %38 : vector<1x256xf32>
    %40 = tpu.concatenate %21, %39 in 0 : vector<1x256xf32>, vector<1x256xf32> -> vector<2x256xf32>
    %c0_8 = arith.constant 0 : index
    %c0_9 = arith.constant 0 : index
    %41 = vector.load %arg3[%c0_8, %c0_9] : memref<2x256xf32, #tpu.memory_space<vmem>>, vector<2x256xf32>
    tpu.vector_store %arg3[%c0_8, %c0_9], %40 {strides = array<i32>} : memref<2x256xf32, #tpu.memory_space<vmem>>, vector<2x256xf32>,
    return
  }
  func.func @transform_0(%arg0: i32) -> (i32, i32) {
    %c0_i32 = arith.constant 0 : i32
    %c0_i32_0 = arith.constant 0 : i32
    return %c0_i32, %arg0 : i32, i32
  }
  func.func @transform_1(%arg0: i32) -> i32 {
    %c0_i32 = arith.constant 0 : i32
    %c0_i32_0 = arith.constant 0 : i32
    return %c0_i32 : i32
  }
  func.func @transform_2(%arg0: i32) -> (i32, i32) {
    %c0_i32 = arith.constant 0 : i32
    %c0_i32_0 = arith.constant 0 : i32
    return %c0_i32, %arg0 : i32, i32
  }
}

</mosaic_0001>

<llo_original>
// kernel: model_forward.2
$region0: #{model_forward.2}
  #allocation0 [shape = 'u32[]', space=smem, size = 0x4, offset = 0x4, fixed_abs, tag = 'smem constant byte address 0x4 - core index']
  #allocation1 [shape = 'u32[144,128]{1,0:T(1,128)}', space=vmem, size = 0x12000, scoped, tag = 'internal scratch']
  %s0 = inlined_call_operand.vmem [shape: f32[10], index: 0, kind: input, shape index: {}]
  %s1 = inlined_call_operand.vmem [shape: f32[512,4], index: 1, kind: input, shape index: {}]
  %s2 = inlined_call_operand.hbm [shape: f32[2,512], index: 2, kind: output, shape index: {}]
  %s3 = sld [smem:[#allocation0]]
  $region45: #{model_forward.2} parent=0
    _
  %s5 = ssub.s32 1, %s3
  %s6 = scalar_select 0, %s5, %s3
  $region1: #{model_forward.2} parent=0
    #allocation2 [shape = 'u8[512]{0}', space=smem, size = 0x200, scoped, tag = 'input window, operand 1, single buffered']
    #allocation3 [shape = 's32[2]{0}', space=sflag, size = 0x8, scoped, tag = 'scoped memory for model_forward.2']
    #allocation4 [shape = 's32[2]{0}', space=sflag, size = 0x8, scoped, tag = 'scoped memory for model_forward.2']
    #allocation5 [shape = 'u8[4096]{0}', space=vmem, size = 0x1000, scoped, tag = 'output window, operand 0']
    %7 = vsyncpa [#allocation4], 0
    %8 = vsyncpa [#allocation3], 0
    %s9 = scalar_lea.sflag [#allocation3], 1
    %10 = vsyncpa %s9, 0
    loop: start=0, step=1, limit=4
    $region2: #{model_forward.2} parent=1 // loop_pre_header
      _
    $region3: #{model_forward.2} parent=1 // loop_header
      %s12 = sphi 0, %s16
      %p13 = scmp.ge.s32.totalorder %s12, 4
      %s22 = sphi 0, %s24
      %s25 = sphi 0, %s22
      %s26 = sphi 0, %s25
      %s42 = sphi 0, %s26
      %s46 = sphi 0, %s46
      %s48 = sphi 0, %s46
      %s49 = sphi 0, %s48
      %s63 = sphi 0, %s49
      %s69 = sphi 0, %s71
      %s72 = sphi 0, %s69
      %s73 = sphi 0, %s72
      %s89 = sphi 0, %s73
    $region4: #{model_forward.2} parent=1 // loop_header_branch
      %15 = sbr.rel (%p13) target = $region8
    $region5: #{model_forward.2} parent=1 // loop_body
      %s17 = ssub.s32 %s12, 1
      %s18 = ssub.s32 %s12, 2
      %s19 = sadd.s32 %s12, 1
      %s20 = ssub.s32 %s12, %s19
      %p21 = scmp.eq.s32.totalorder %s20, 0
      %s23 = sadd.s32 %s22, 1
      %s24 = scalar_select %p21, %s22, %s23
      %p27 = pneg %p21
      %p28 = scmp.eq.s32.totalorder %s12, 1
      %p29 = por %p27, %p28
      %p30 = scmp.ne.s32.totalorder %s22, %s25
      %p31 = scmp.eq.s32.totalorder %s12, 0
      %p32 = por %p30, %p31
      %p33 = scmp.ne.s32.totalorder %s22, %s25
      %p34 = scmp.eq.s32.totalorder %s17, 1
      %p35 = por %p33, %p34
      %p36 = scmp.ne.s32.totalorder %s25, %s26
      %p37 = scmp.eq.s32.totalorder %s17, 0
      %p38 = por %p36, %p37
      %p39 = scmp.ne.s32.totalorder %s25, %s26
      %p40 = scmp.eq.s32.totalorder %s18, 1
      %p41 = por %p39, %p40
      %p43 = scmp.ne.s32.totalorder %s26, %s42
      %p44 = scmp.eq.s32.totalorder %s18, 0
      %p45 = por %p43, %p44
      %s47 = sadd.s32 %s46, 1
      %p50 = scmp.eq.s32.totalorder %s12, 1
      %p51 = scmp.ne.s32.totalorder %s46, %s48
      %p52 = scmp.eq.s32.totalorder %s12, 0
      %p53 = por %p51, %p52
      %p54 = scmp.ne.s32.totalorder %s46, %s48
      %p55 = scmp.eq.s32.totalorder %s17, 1
      %p56 = por %p54, %p55
      %p57 = scmp.ne.s32.totalorder %s48, %s49
      %p58 = scmp.eq.s32.totalorder %s17, 0
      %p59 = por %p57, %p58
      %p60 = scmp.ne.s32.totalorder %s48, %s49
      %p61 = scmp.eq.s32.totalorder %s18, 1
      %p62 = por %p60, %p61
      %p64 = scmp.ne.s32.totalorder %s49, %s63
      %p65 = scmp.eq.s32.totalorder %s18, 0
      %p66 = por %p64, %p65
      %s67 = ssub.s32 %s12, %s19
      %p68 = scmp.eq.s32.totalorder %s67, 0
      %s70 = sadd.s32 %s69, 1
      %s71 = scalar_select %p68, %s69, %s70
      %p74 = pneg %p68
      %p75 = scmp.eq.s32.totalorder %s12, 1
      %p76 = por %p74, %p75
      %p77 = scmp.ne.s32.totalorder %s69, %s72
      %p78 = scmp.eq.s32.totalorder %s12, 0
      %p79 = por %p77, %p78
      %p80 = scmp.ne.s32.totalorder %s69, %s72
      %p81 = scmp.eq.s32.totalorder %s17, 1
      %p82 = por %p80, %p81
      %p83 = scmp.ne.s32.totalorder %s72, %s73
      %p84 = scmp.eq.s32.totalorder %s17, 0
      %p85 = por %p83, %p84
      %p86 = scmp.ne.s32.totalorder %s72, %s73
      %p87 = scmp.eq.s32.totalorder %s18, 1
      %p88 = por %p86, %p87
      %p90 = scmp.ne.s32.totalorder %s73, %s89
      %p91 = scmp.eq.s32.totalorder %s18, 0
      %p92 = por %p90, %p91
      %p93 = scmp.le.s32.totalorder 1, %s12
      %p94 = scmp.lt.s32.totalorder %s12, 3
      %p95 = pnand %p93, %p94
      %p96 = pneg %p95
      // Predicated region
      $region9: #{model_forward.2} parent=5 // pred_check
        _
      $region10: #{model_forward.2} parent=5 // pred_check_branch
        %98 = sbr.rel (%p95) target = $region12
      $region11: #{model_forward.2} parent=5 // pred_region
        %s99 = ssub.s32 %s12, 1
        // Predicated region
        $region13: #{model_forward.2} parent=11 // pred_check
          %p100 = pneg %p59
        $region14: #{model_forward.2} parent=11 // pred_check_branch
          %102 = sbr.rel (%p100) target = $region16
        $region15: #{model_forward.2} parent=11 // pred_region
          %s104 = ssub.s32 16, 16
          %105 = vsyncadd [#allocation4], %s104
          %s107 = sshll.u32 %s0, 4
          %s108 = int_to_ptr.vmem [resolvable:$true] %s107
          %110 = dma.vmem_to_smem %s108, 16, [#allocation2], [#allocation4]
        $region16: #{model_forward.2} parent=11 // pred_fallthru
          _
      $region12: #{model_forward.2} parent=5 // pred_fallthru
        _
      %p111 = scmp.lt.s32.totalorder %s12, 2
      // Predicated region
      $region17: #{model_forward.2} parent=5 // pred_check
        %p112 = pneg %p111
      $region18: #{model_forward.2} parent=5 // pred_check_branch
        %114 = sbr.rel (%p112) target = $region20
      $region19: #{model_forward.2} parent=5 // pred_region
        // Predicated region
        $region21: #{model_forward.2} parent=19 // pred_check
          %p115 = pneg %p32
        $region22: #{model_forward.2} parent=19 // pred_check_branch
          %117 = sbr.rel (%p115) target = $region24
        $region23: #{model_forward.2} parent=19 // pred_region
          %s118 = smul.u32 2, %s12
          %p119 = scmp.lt.s32.totalorder %s118, 3
          %s120 = scalar_select %p119, %s118, 3
          %s121 = smul.addr %s120, 4
          %s122 = scalar_lea.vmem %s1, %s121
          %s123 = smul.u32 2, %s12
        $region24: #{model_forward.2} parent=19 // pred_fallthru
          _
      $region20: #{model_forward.2} parent=5 // pred_fallthru
        _
      %p124 = scmp.le.s32.totalorder 1, %s12
      %p125 = scmp.lt.s32.totalorder %s12, 3
      %p126 = pnand %p124, %p125
      %p127 = pneg %p126
      // Predicated region
      $region25: #{model_forward.2} parent=5 // pred_check
        _
      $region26: #{model_forward.2} parent=5 // pred_check_branch
        %129 = sbr.rel (%p126) target = $region28
      $region27: #{model_forward.2} parent=5 // pred_region
        #allocation6 [shape = 'u8[4096]{0}', space=vmem, size = 0x1000, dematerialized = true, scoped, tag = 'FusionAdapter Buffer %fusion.1 = f32[4,512]{1,0:T(4,128)} fusion(%param_1.1), kind=kLoop, calls=%fused_computation.1.clone, metadata={op_name="jit(model_forward)/transpose" stack_frame_id=15}']
        %s130 = ssub.s32 %s12, 1
        // Predicated region
        $region29: #{model_forward.2} parent=27 // pred_check
          %p131 = pneg %p59
        $region30: #{model_forward.2} parent=27 // pred_check_branch
          %133 = sbr.rel (%p131) target = $region32
        $region31: #{model_forward.2} parent=27 // pred_region
          %134 = dma.done [#allocation4], 16
        $region32: #{model_forward.2} parent=27 // pred_fallthru
          _
        %135 = sfence
        %s136 = smul.u32 2, %s17
        %p137 = scmp.lt.s32.totalorder %s136, 3
        %s138 = scalar_select %p137, %s136, 3
        %s139 = smul.addr %s138, 4
        %s140 = scalar_lea.vmem %s1, %s139
        %p141 = pneg %p38
        %p142 = pneg %p35
        %p143 = pneg %p59
        %p144 = pneg %p56
        %p145 = pneg %p85
        %p146 = pneg %p82
        %s147 = sand.u32 %s72, 1
        %s148 = scalar_lea.sflag [#allocation3], %s147
        %s149 = sand.u32 %s72, 1
        %s150 = smul.addr %s149, 4
        %s151 = scalar_lea.vmem [#allocation5], %s150
        %s152 = smul.u32 2, %s17
        %p153 = scmp.lt.s32.totalorder %s152, 3
        %s154 = scalar_select %p153, %s152, 3
        %s155 = smul.addr %s154, 4
        %s156 = scalar_lea.vmem %s1, %s155
        %s157 = smul.u32 2, %s17
        %s158 = smul.u32 2, %s17
        %v159 = vld [vmem:[%s156] sm:$0xf]
        %s161 = ssub.s32 16, 1
        %162 = vst [vmem:[#allocation6] sm:%s161] %v159
        %s163 = scalar_lea.vmem %s156, 4
        %v164 = vld [vmem:[%s163] sm:$0xf]
        %s165 = scalar_lea.vmem [#allocation6], 4
        %s167 = ssub.s32 16, 1
        %168 = vst [vmem:[%s165] sm:%s167] %v164
        %v169 = vld [vmem:[#allocation6] ss:$4 sm:$0x3]
        %s170 = scalar_lea.vmem [#allocation6], 1
        %v171 = vld [vmem:[%s170] ss:$4 sm:$0x3]
        %s172 = scalar_lea.vmem [#allocation6], 2
        %v173 = vld [vmem:[%s172] ss:$4 sm:$0x3]
        %s174 = scalar_lea.vmem [#allocation6], 3
        %v175 = vld [vmem:[%s174] ss:$4 sm:$0x3]
        %s176 = sld [smem:[#allocation2]]
        %v177 = vstv %s176
        %v178 = vmul.f32 %v169, %v177
        %s179 = sld [smem:[#allocation2 + $0x1]]
        %v180 = vstv %s179
        %v181 = vmul.f32 %v171, %v180
        %v182 = vadd.f32 %v178, %v181
        %s183 = sld [smem:[#allocation2 + $0x2]]
        %v184 = vstv %s183
        %v185 = vmul.f32 %v173, %v184
        %v186 = vadd.f32 %v182, %v185
        %s187 = sld [smem:[#allocation2 + $0x3]]
        %v188 = vstv %s187
        %v189 = vmul.f32 %v175, %v188
        %v190 = vadd.f32 %v186, %v189
        %s191 = sld [smem:[#allocation2 + $0x8]]
        %v192 = vstv %s191
        %v193 = vadd.f32 %v190, %v192
        %s194 = sld [smem:[#allocation2 + $0x4]]
        %v195 = vstv %s194
        %v196 = vmul.f32 %v169, %v195
        %s197 = sld [smem:[#allocation2 + $0x5]]
        %v198 = vstv %s197
        %v199 = vmul.f32 %v171, %v198
        %v200 = vadd.f32 %v196, %v199
        %s201 = sld [smem:[#allocation2 + $0x6]]
        %v202 = vstv %s201
        %v203 = vmul.f32 %v173, %v202
        %v204 = vadd.f32 %v200, %v203
        %s205 = sld [smem:[#allocation2 + $0x7]]
        %v206 = vstv %s205
        %v207 = vmul.f32 %v175, %v206
        %v208 = vadd.f32 %v204, %v207
        %s209 = sld [smem:[#allocation2 + $0x9]]
        %v210 = vstv %s209
        %v211 = vadd.f32 %v208, %v210
        %v213 = vlaneseq
        %v214 = vshrl.u32 %v213, 7
        %v215 = vsub.s32 0, %v214
        %v216 = vrot.slane %v193, %v215
        %v217 = vlaneseq
        %v218 = vshrl.u32 %v217, 7
        %v219 = vsub.s32 1, %v218
        %v220 = vrot.slane %v193, %v219
        %v224 = vlaneseq
        %v225 = vshrl.u32 %v224, 7
        %v226 = vsub.s32 0, %v225
        %v227 = vrot.slane %v211, %v226
        %v228 = vlaneseq
        %v229 = vshrl.u32 %v228, 7
        %v230 = vsub.s32 1, %v229
        %v231 = vrot.slane %v211, %v230
        %vm234 = vcmask 1040384
        %v235 = vsel %vm234, %v216, %v227
        %v236 = vsel %vm234, %v220, %v231
        %v239 = vcombine.low %v235, %v236
        %v241 = vunpack.c.l.s4 1983009808
        %v242 = vunpack.c.0.s8 %v241
        %v243 = vlaneseq
        %v244 = vshrl.u32 %v243, 7
        %v245 = vsub.s32 %v242, %v244
        %v246 = vrot.slane %v239, %v245
        %248 = vst [vmem:[%s151] sm:$0xf] %v246
        %s249 = sand.u32 %s72, 1
        %s250 = scalar_lea.sflag [#allocation3], %s249
        %s251 = sand.u32 %s72, 1
        %s252 = smul.addr %s251, 4
        %s253 = scalar_lea.vmem [#allocation5], %s252
        // Predicated region
        $region33: #{model_forward.2} parent=27 // pred_check
          %p254 = pneg %p82
        $region34: #{model_forward.2} parent=27 // pred_check_branch
          %256 = sbr.rel (%p254) target = $region36
        $region35: #{model_forward.2} parent=27 // pred_region
          %s257 = smul.u32 2, %s17
          %s259 = ssub.s32 64, 64
          %260 = vsyncadd %s250, %s259
          %s261 = smul.addr %s257, 32
          %s262 = scalar_lea.hbm %s2, %s261
          %s264 = sshll.u32 %s253, 4
          %s265 = int_to_ptr.vmem [resolvable:$true] %s264
          %267 = dma.vmem_to_hbm [thread:$0]  %s265, 64, %s262, %s250
        $region36: #{model_forward.2} parent=27 // pred_fallthru
          _
      $region28: #{model_forward.2} parent=5 // pred_fallthru
        _
      %p268 = scmp.le.s32.totalorder 2, %s12
      // Predicated region
      $region37: #{model_forward.2} parent=5 // pred_check
        %p269 = pneg %p268
      $region38: #{model_forward.2} parent=5 // pred_check_branch
        %271 = sbr.rel (%p269) target = $region40
      $region39: #{model_forward.2} parent=5 // pred_region
        %s272 = ssub.s32 %s12, 2
        // Predicated region
        $region41: #{model_forward.2} parent=39 // pred_check
          %p273 = pneg %p88
        $region42: #{model_forward.2} parent=39 // pred_check_branch
          %275 = sbr.rel (%p273) target = $region44
        $region43: #{model_forward.2} parent=39 // pred_region
          %s276 = sand.u32 %s73, 1
          %s277 = scalar_lea.sflag [#allocation3], %s276
          %s278 = sand.u32 %s73, 1
          %s279 = smul.addr %s278, 4
          %s280 = scalar_lea.vmem [#allocation5], %s279
          %281 = dma.done %s277, 64
        $region44: #{model_forward.2} parent=39 // pred_fallthru
          _
      $region40: #{model_forward.2} parent=5 // pred_fallthru
        _
    $region6: #{model_forward.2} parent=1 // loop_footer
      %s16 = sadd.s32 1, %s12
    $region7: #{model_forward.2} parent=1 // loop_footer_branch
      %11 = sbr.rel target = $region3
    $region8: #{model_forward.2} parent=1 // loop_exit
      _
    %282 = vsyncpa [#allocation3], 1
    %s283 = scalar_lea.sflag [#allocation3], 1
    %284 = vsyncpa %s283, 1
    %285 = vsyncpa [#allocation4], 1
    %s286 = scalar_lea.sflag [#allocation4], 1
    %287 = vsyncpa %s286, 1

</llo_original>
